<compile_context>
chip_gen: v7x
topology: tpu7x:2x2x1
jax: 0.10.0
libtpu: 0.0.40
codegen_flags: <defaults>
</compile_context>

<pallas_src>
from functools import partial

import jax
import jax.numpy as jnp
from jax.experimental import pallas as pl
from jax.experimental.pallas import tpu as pltpu


# --------------------------------------------------------------------------- #
# Kernels
# --------------------------------------------------------------------------- #
def _tile_matmul(x_ref, w_ref, compute_dtype):
    """MXU matmul of the current tiles with f32 accumulation.

    Handles both the squeezed (2-D) one-c-per-step layout and the c-blocked
    (3-D, batched einsum) layout used to amortize grid overhead at tiny shapes.
    """
    xv = x_ref[...]
    wv = w_ref[...]
    if compute_dtype is not None and xv.dtype != compute_dtype:
        # Optional bf16 MXU inputs (v6e/v7x); accumulation + scaling stay f32.
        xv = xv.astype(compute_dtype)
        wv = wv.astype(compute_dtype)
    if xv.ndim == 2:
        return jnp.dot(xv, wv, preferred_element_type=jnp.float32)
    return jnp.einsum("cmk,ckn->cmn", xv, wv, preferred_element_type=jnp.float32)


def _bmm_scale_kernel(inv_ref, x_ref, w_ref, o_ref, *, compute_dtype=None):
    """Single-K-tile case: no accumulator scratch needed."""
    o_ref[...] = (_tile_matmul(x_ref, w_ref, compute_dtype) * inv_ref[0]).astype(
        o_ref.dtype
    )


def _bmm_scale_acc_kernel(inv_ref, x_ref, w_ref, o_ref, acc_ref, *, compute_dtype=None):
    """K-tiled case: accumulate in f32 VMEM scratch, finalize on the last k step."""
    ki = pl.program_id(3)

    @pl.when(ki == 0)
    def _init():
        acc_ref[...] = jnp.zeros_like(acc_ref)

    acc_ref[...] += _tile_matmul(x_ref, w_ref, compute_dtype)

    @pl.when(ki == pl.num_programs(3) - 1)
    def _finalize():
        # Normalization scalar folded into the output on the f32 accumulator.
        o_ref[...] = (acc_ref[...] * inv_ref[0]).astype(o_ref.dtype)


# --------------------------------------------------------------------------- #
# Tiling helpers
# --------------------------------------------------------------------------- #
def _pick_tile(dim, target, align):
    """Largest tile <= target that is either the full dim or an align-multiple divisor.

    (Block last-two dims must be multiples of (8, 128) or span the full dim.)
    """
    if dim <= target:
        return dim
    t = (target // align) * align
    while t >= align:
        if dim % t == 0:
            return t
        t -= align
    # No aligned divisor <= target: fall back to the (always-legal) full dim.
    return dim


def _pick_c_block(c, tm, tn, tk, *, work_threshold=1 << 21, vmem_budget=20 << 20):
    """Batch several c per grid step when each per-c matmul tile is tiny.

    Amortizes the ~0.35 us per-grid-step pipeline overhead for small shapes; for
    real matmul tiles (tm*tn*tk >= ~2M MACs) one c per step is already enough work.
    """
    if tm * tn * tk >= work_threshold:
        return 1
    per_c_bytes = 4 * (2 * tm * tk + 2 * tk * tn + 3 * tm * tn)  # dbl-buffered IO + acc
    for cand in range(min(c, 64), 0, -1):
        if c % cand == 0 and cand * per_c_bytes <= vmem_budget:
            return cand
    return 1


def _normalization_inverse(weight):
    """1 / max(1, RMS(weight)/init_scale) as a (1,)-f32 array (SMEM scalar prefetch).

    TODO(synk): this tiny reduction re-reads the full weight from HBM before the
    bmm (~2x weight traffic when BT is small); cache it when the weight is static
    across calls, or fuse the squared-sum into the kernel that produced `weight`.
    """
    d_in, d_out = weight.shape[-2], weight.shape[-1]
    rms = jnp.sqrt(jnp.mean(weight.astype(jnp.float32) ** 2.0) + 1e-08)
    init_scale = (min(d_in, d_out) / (d_in * d_in)) ** 0.5
    divisor = jnp.maximum(jnp.float32(1.0), rms / jnp.float32(init_scale))
    return (1.0 / divisor).reshape((1,)).astype(jnp.float32)


# --------------------------------------------------------------------------- #
# Wrapper
# --------------------------------------------------------------------------- #
def bilinear_btt_w_k_projection(x, weight, *, compute_dtype=None, c_block=None):
    """Pallas TPU implementation of BilinearBTT_W_K_Projection.forward.

    x:       (c, BT, d_in)   float32
    weight:  (c, d_in, d_out) float32
    returns: (c, BT, d_out) in x.dtype

    compute_dtype: optional MXU input dtype (e.g. jnp.bfloat16 on v6e/v7x when the
        caller's tolerance allows); accumulation and normalization stay f32.
    c_block: optional override of how many batch (c) entries are processed per
        grid step (must divide c).
    """
    c, BT, d_in = x.shape
    cw, d_in_w, d_out = weight.shape
    assert c == cw and d_in == d_in_w, "x / weight batch or contraction mismatch"

    inv = _normalization_inverse(weight)

    # ---- generation-aware tile targets ------------------------------------
    try:
        device_kind = jax.devices()[0].device_kind.lower()
    except Exception:  # defensive: fall back to the conservative (v7x) budget
        device_kind = ""
    is_v7 = "v7" in device_kind
    tm_target = 512 if is_v7 else 1024   # v7x: 64 MiB VMEM; v5e/v6e: 128 MiB
    tn_target = 256
    tk_target = 256

    tm = _pick_tile(BT, tm_target, 8)        # sublane dim of x / out
    tn = _pick_tile(d_out, tn_target, 128)   # lane dim of w / out
    tk = _pick_tile(d_in, tk_target, 128)    # lane dim of x, sublane dim of w

    if c_block is not None:
        assert c % c_block == 0, "c_block must divide c"
        cb = c_block
    else:
        cb = _pick_c_block(c, tm, tn, tk)

    gm, gn, gk = BT // tm, d_out // tn, d_in // tk
    grid = (c // cb, gm, gn, gk)

    if cb == 1:
        # Squeeze the c dim: plain 2-D MXU matmul per step.
        x_block, w_block, o_block = (None, tm, tk), (None, tk, tn), (None, tm, tn)
        acc_shape = (tm, tn)
    else:
        x_block, w_block, o_block = (cb, tm, tk), (cb, tk, tn), (cb, tm, tn)
        acc_shape = (cb, tm, tn)

    # index_maps: the weight is independent of the BT (m) axis, so when d_in/d_out
    # fit in one tile (gn == gk == 1) the weight block stays resident in VMEM for
    # the whole BT sweep (no re-DMA).  The output is independent of k (accumulator
    # stays resident across the reduction axis).
    x_map = lambda ci, mi, ni, ki, inv_ref: (ci, mi, ki)
    w_map = lambda ci, mi, ni, ki, inv_ref: (ci, ki, ni)
    o_map = lambda ci, mi, ni, ki, inv_ref: (ci, mi, ni)

    if gk == 1:
        kernel = partial(_bmm_scale_kernel, compute_dtype=compute_dtype)
        scratch_shapes = []
    else:
        kernel = partial(_bmm_scale_acc_kernel, compute_dtype=compute_dtype)
        scratch_shapes = [pltpu.VMEM(acc_shape, jnp.float32)]

    # Explicit scoped-VMEM limit with headroom for the double-buffered tiles.
    vmem_need = 4 * cb * (2 * tm * tk + 2 * tk * tn + 3 * tm * tn)
    vmem_cap = (56 << 20) if is_v7 else (100 << 20)
    vmem_limit = int(min(max(32 << 20, vmem_need + (8 << 20)), vmem_cap))

    cost = pl.CostEstimate(
        flops=2 * c * BT * d_in * d_out,
        transcendentals=0,
        bytes_accessed=4 * (c * BT * d_in + c * d_in * d_out + c * BT * d_out),
    )

    # TODO(synk): when d_out < 128 the output stores are lane-masked (vst.msk); if
    # such shapes are ever hot, pad d_out to 128 (or emit a lane-dense
    # (BT, c*d_out) slab) on the caller side.
    return pl.pallas_call(
        kernel,
        out_shape=jax.ShapeDtypeStruct((c, BT, d_out), x.dtype),
        grid_spec=pltpu.PrefetchScalarGridSpec(
            num_scalar_prefetch=1,
            grid=grid,
            in_specs=[
                pl.BlockSpec(x_block, x_map),
                pl.BlockSpec(w_block, w_map),
            ],
            out_specs=pl.BlockSpec(o_block, o_map),
            scratch_shapes=scratch_shapes,
        ),
        compiler_params=pltpu.CompilerParams(
            dimension_semantics=("parallel", "parallel", "parallel", "arbitrary"),
            vmem_limit_bytes=vmem_limit,
        ),
        cost_estimate=cost,
    )(inv, x, weight)


# --------------------------------------------------------------------------- #
# Reference & checks
# --------------------------------------------------------------------------- #
def _reference(x, weight):
    """Module-faithful reference (normalize the weight, then bmm) in full f32."""
    rms = jnp.sqrt(jnp.mean(weight ** 2.0) + 1e-08)
    d_in, d_out = weight.shape[-2], weight.shape[-1]
    init_scale = (min(d_in, d_out) / (d_in * d_in)) ** 0.5
    w_normed = weight / jnp.maximum(1.0, rms / init_scale)
    return jnp.einsum("cbd,cde->cbe", x, w_normed,
                      precision=jax.lax.Precision.HIGHEST)


def _check(x, weight, out, name):
    c, BT, _ = x.shape
    d_out = weight.shape[-1]
    assert out.shape == (c, BT, d_out), f"{name}: bad output shape {out.shape}"
    # (a) Tight check against a structurally-matched reference (scale folded into
    #     the output, default matmul precision -- same structure as the kernel).
    matched = jnp.einsum("cbd,cde->cbe", x, weight) * _normalization_inverse(weight)[0]
    assert jnp.allclose(out, matched, atol=1e-3, rtol=1e-3), f"{name}: matched-ref mismatch"
    # (b) Check against the module-faithful f32 reference; tolerance covers TPU's
    #     default bf16-operand matmul precision plus the (mathematically
    #     equivalent) reordering of the normalization scalar.
    exact = _reference(x, weight)
    assert jnp.allclose(out, exact, atol=2e-2, rtol=2e-2), f"{name}: module-ref mismatch"


if __name__ == "__main__":
    key = jax.random.PRNGKey(0)
    k_w1, k_x1, k_w2, k_x2 = jax.random.split(key, 4)

    # --- Test 1: module-sized small shapes (all c batched into one grid step) ---
    c, BT, d_in, d_out = 4, 16, 32, 32
    w1 = jax.random.normal(k_w1, (c, d_in, d_out), dtype=jnp.float32)
    x1 = jax.random.normal(k_x1, (c, BT, d_in), dtype=jnp.float32)
    out1 = jax.block_until_ready(bilinear_btt_w_k_projection(x1, w1))
    _check(x1, w1, out1, "small")

    # --- Test 2: exercises the K-tiled f32-accumulator path ---------------------
    c2, BT2, d_in2, d_out2 = 3, 64, 512, 256
    w2 = jax.random.normal(k_w2, (c2, d_in2, d_out2), dtype=jnp.float32)
    x2 = jax.random.normal(k_x2, (c2, BT2, d_in2), dtype=jnp.float32)
    out2 = jax.block_until_ready(bilinear_btt_w_k_projection(x2, w2))
    _check(x2, w2, out2, "tiled-k")

    # --- Test 3: multiple c-blocks per grid (c-block indexing path) -------------
    out3 = jax.block_until_ready(bilinear_btt_w_k_projection(x1, w1, c_block=2))
    _check(x1, w1, out3, "c-blocked")

    print("KERNEL_OK")
</pallas_src>

<mosaic_0001>
module attributes {stable_mosaic.version = 11 : i64} {
  func.func @_bmm_scale_kernel(%arg0: i32, %arg1: i32, %arg2: i32, %arg3: i32, %arg4: memref<1xf32, #tpu.memory_space<smem>>, %arg5: memref<4x16x32xf32, #tpu.memory_space<vmem>>, %arg6: memref<4x32x32xf32, #tpu.memory_space<vmem>>, %arg7: memref<4x16x32xf32, #tpu.memory_space<vmem>>) attributes {dimension_semantics = [#tpu.dimension_semantics<parallel>, #tpu.dimension_semantics<parallel>, #tpu.dimension_semantics<parallel>, #tpu.dimension_semantics<arbitrary>], iteration_bounds = array<i64: 1, 1, 1, 1>, scalar_prefetch = 1 : i64, scratch_operands = 0 : i64, tpu.core_type = #tpu.core_type<tc>, window_params = [{transform_indices = @transform_0, window_bounds = array<i64: 4, 16, 32>}, {transform_indices = @transform_1, window_bounds = array<i64: 4, 32, 32>}, {transform_indices = @transform_2, window_bounds = array<i64: 4, 16, 32>}]} {
    %c0 = arith.constant 0 : index
    %c0_0 = arith.constant 0 : index
    %c0_1 = arith.constant 0 : index
    %0 = vector.load %arg5[%c0, %c0_0, %c0_1] : memref<4x16x32xf32, #tpu.memory_space<vmem>>, vector<4x16x32xf32>
    %c0_2 = arith.constant 0 : index
    %c0_3 = arith.constant 0 : index
    %c0_4 = arith.constant 0 : index
    %1 = vector.load %arg6[%c0_2, %c0_3, %c0_4] : memref<4x32x32xf32, #tpu.memory_space<vmem>>, vector<4x32x32xf32>
    "tpu.trace_start"() <{level = 10 : i32, message = "cmk,ckn->cmn"}> : () -> ()
    %cst = arith.constant dense<0.000000e+00> : vector<4x16x32xf32>
    %2 = tpu.matmul %0, %1, %cst {dimension_numbers = #tpu.dot_dimension_numbers<[2], [1], [1], [2], [0, 0, 0, 1, 1, 2], [0], [0]>} : vector<4x16x32xf32>, vector<4x32x32xf32>, vector<4x16x32xf32> -> vector<4x16x32xf32>
    "tpu.trace_stop"() : () -> ()
    %c0_5 = arith.constant 0 : index
    %3 = memref.load %arg4[%c0_5] : memref<1xf32, #tpu.memory_space<smem>>
    %4 = vector.broadcast %3 : f32 to vector<4x16x32xf32>
    %5 = arith.mulf %2, %4 : vector<4x16x32xf32>
    %c0_6 = arith.constant 0 : index
    %c0_7 = arith.constant 0 : index
    %c0_8 = arith.constant 0 : index
    %6 = vector.load %arg7[%c0_6, %c0_7, %c0_8] : memref<4x16x32xf32, #tpu.memory_space<vmem>>, vector<4x16x32xf32>
    tpu.vector_store %arg7[%c0_6, %c0_7, %c0_8], %5 {strides = array<i32>} : memref<4x16x32xf32, #tpu.memory_space<vmem>>, vector<4x16x32xf32>,
    return
  }
  func.func @transform_0(%arg0: i32, %arg1: i32, %arg2: i32, %arg3: i32, %arg4: memref<1xf32, #tpu.memory_space<smem>>) -> (i32, i32, i32) {
    %c0_i32 = arith.constant 0 : i32
    return %arg0, %arg1, %arg3 : i32, i32, i32
  }
  func.func @transform_1(%arg0: i32, %arg1: i32, %arg2: i32, %arg3: i32, %arg4: memref<1xf32, #tpu.memory_space<smem>>) -> (i32, i32, i32) {
    %c0_i32 = arith.constant 0 : i32
    return %arg0, %arg3, %arg2 : i32, i32, i32
  }
  func.func @transform_2(%arg0: i32, %arg1: i32, %arg2: i32, %arg3: i32, %arg4: memref<1xf32, #tpu.memory_space<smem>>) -> (i32, i32, i32) {
    %c0_i32 = arith.constant 0 : i32
    return %arg0, %arg1, %arg2 : i32, i32, i32
  }
}

</mosaic_0001>

<llo_original>
// kernel: tpu_custom_call.1
$region0: #{tpu_custom_call.1}
  #allocation0 [shape = 'u32[]', space=smem, size = 0x4, offset = 0x4, fixed_abs, tag = 'smem constant byte address 0x4 - core index']
  #allocation1 [shape = 'u32[144,128]{1,0:T(1,128)}', space=vmem, size = 0x12000, scoped, tag = 'internal scratch']
  #allocation2 [shape = 's32[1]{0}', space=sflag, size = 0x4, scoped, tag = 'scoped memory for tpu_custom_call.1']
  #allocation3 [shape = 'f32[1]{0:T(128)S(6)}', space=smem, size = 0x200, scoped, tag = 'prefetched SMEM operand 0']
  %s0 = inlined_call_operand.<no memory space> [shape: f32[1], index: 0, kind: input, shape index: {}]
  %s1 = inlined_call_operand.hbm [shape: f32[4,16,32], index: 1, kind: input, shape index: {}]
  %s2 = inlined_call_operand.hbm [shape: f32[4,32,32], index: 2, kind: input, shape index: {}]
  %s3 = inlined_call_operand.hbm [shape: f32[4,16,32], index: 3, kind: output, shape index: {}]
  %s4 = sld [smem:[#allocation0]]
  $region26: #{tpu_custom_call.1} parent=0
    _
  %s6 = ssub.s32 1, %s4
  %s7 = scalar_select 0, %s6, %s4
  %8 = sst [smem:[#allocation3]] %s0
  $region1: #{tpu_custom_call.1} parent=0
    #allocation4 [shape = 'u8[32768]{0}', space=vmem, size = 0x8000, scoped, tag = 'input window, operand 1, single buffered']
    #allocation5 [shape = 's32[1]{0}', space=sflag, size = 0x4, scoped, tag = 'scoped memory for tpu_custom_call.1']
    #allocation6 [shape = 's32[1]{0}', space=sflag, size = 0x4, scoped, tag = 'scoped memory for tpu_custom_call.1']
    #allocation7 [shape = 'u8[65536]{0}', space=vmem, size = 0x10000, scoped, tag = 'input window, operand 2, single buffered']
    #allocation8 [shape = 's32[1]{0}', space=sflag, size = 0x4, scoped, tag = 'scoped memory for tpu_custom_call.1']
    #allocation9 [shape = 'u8[32768]{0}', space=vmem, size = 0x8000, scoped, tag = 'output window, operand 0, single buffered']
    %9 = vsyncpa [#allocation5], 0
    %10 = vsyncpa [#allocation8], 0
    %11 = vsyncpa [#allocation6], 0
    // Predicated region
    $region2: #{tpu_custom_call.1} parent=1 // pred_check
      _
    $region3: #{tpu_custom_call.1} parent=1 // pred_check_branch
      %13 = sbr.rel (0) target = $region5
    $region4: #{tpu_custom_call.1} parent=1 // pred_region
      %s15 = ssub.s32 1024, 1024
      %16 = vsyncadd [#allocation5], %s15
      %s17 = sshll.u32 [#allocation4], 4
      %s18 = int_to_ptr.vmem [resolvable:$true] %s17
      %23 = dma.hbm_to_vmem [thread:$0]  %s1, 1024, %s18, [#allocation5], 128, 128, 8
    $region5: #{tpu_custom_call.1} parent=1 // pred_fallthru
      _
    // Predicated region
    $region6: #{tpu_custom_call.1} parent=1 // pred_check
      _
    $region7: #{tpu_custom_call.1} parent=1 // pred_check_branch
      %25 = sbr.rel (0) target = $region9
    $region8: #{tpu_custom_call.1} parent=1 // pred_region
      %s27 = ssub.s32 2048, 2048
      %28 = vsyncadd [#allocation8], %s27
      %s29 = sshll.u32 [#allocation7], 4
      %s30 = int_to_ptr.vmem [resolvable:$true] %s29
      %35 = dma.hbm_to_vmem [thread:$0]  %s2, 2048, %s30, [#allocation8], 128, 128, 8
    $region9: #{tpu_custom_call.1} parent=1 // pred_fallthru
      _
    // Predicated region
    $region10: #{tpu_custom_call.1} parent=1 // pred_check
      _
    $region11: #{tpu_custom_call.1} parent=1 // pred_check_branch
      %37 = sbr.rel (0) target = $region13
    $region12: #{tpu_custom_call.1} parent=1 // pred_region
      %38 = dma.done [#allocation5], 1024
    $region13: #{tpu_custom_call.1} parent=1 // pred_fallthru
      _
    // Predicated region
    $region14: #{tpu_custom_call.1} parent=1 // pred_check
      _
    $region15: #{tpu_custom_call.1} parent=1 // pred_check_branch
      %40 = sbr.rel (0) target = $region17
    $region16: #{tpu_custom_call.1} parent=1 // pred_region
      %41 = dma.done [#allocation8], 2048
    $region17: #{tpu_custom_call.1} parent=1 // pred_fallthru
      _
    %v42 = vld [vmem:[#allocation4] sm:$0xff]
    %v43 = vld [vmem:[#allocation4 + $0x8] sm:$0xff]
    %v44 = vld [vmem:[#allocation4 + $0x10] sm:$0xff]
    %v45 = vld [vmem:[#allocation4 + $0x18] sm:$0xff]
    %v46 = vld [vmem:[#allocation4 + $0x20] sm:$0xff]
    %v47 = vld [vmem:[#allocation4 + $0x28] sm:$0xff]
    %v48 = vld [vmem:[#allocation4 + $0x30] sm:$0xff]
    %v49 = vld [vmem:[#allocation4 + $0x38] sm:$0xff]
    %v50 = vld [vmem:[#allocation7] sm:$0xff]
    %v51 = vld [vmem:[#allocation7 + $0x8] sm:$0xff]
    %v52 = vld [vmem:[#allocation7 + $0x10] sm:$0xff]
    %v53 = vld [vmem:[#allocation7 + $0x18] sm:$0xff]
    %v54 = vld [vmem:[#allocation7 + $0x20] sm:$0xff]
    %v55 = vld [vmem:[#allocation7 + $0x28] sm:$0xff]
    %v56 = vld [vmem:[#allocation7 + $0x30] sm:$0xff]
    %v57 = vld [vmem:[#allocation7 + $0x38] sm:$0xff]
    %v58 = vld [vmem:[#allocation7 + $0x40] sm:$0xff]
    %v59 = vld [vmem:[#allocation7 + $0x48] sm:$0xff]
    %v60 = vld [vmem:[#allocation7 + $0x50] sm:$0xff]
    %v61 = vld [vmem:[#allocation7 + $0x58] sm:$0xff]
    %v62 = vld [vmem:[#allocation7 + $0x60] sm:$0xff]
    %v63 = vld [vmem:[#allocation7 + $0x68] sm:$0xff]
    %v64 = vld [vmem:[#allocation7 + $0x70] sm:$0xff]
    %v65 = vld [vmem:[#allocation7 + $0x78] sm:$0xff]
    %vm66 = vcmask 261120
    %v68 = vsel %vm66, %v42, 0
    %v71 = vsel %vm66, %v43, 0
    %73 = vmatprep.subr.mxu0 0.0
    %74 = vmatpush1.msra.mxu0 %v50
    %75 = vmatprep.subr.mxu0 0.0
    %76 = vmatpush1.msra.mxu0 %v51
    %77 = vmatprep.subr.mxu0 0.0
    %78 = vmatpush1.msra.mxu0 %v52
    %79 = vmatprep.subr.mxu0 0.0
    %80 = vmatpush1.msra.mxu0 %v53
    %81 = vmatprep.subr.mxu0 0.0
    %82 = vmatpush1.msra.mxu0 0.0
    %83 = vmatprep.subr.mxu0 0.0
    %84 = vmatpush1.msra.mxu0 0.0
    %85 = vmatprep.subr.mxu0 0.0
    %86 = vmatpush1.msra.mxu0 0.0
    %87 = vmatprep.subr.mxu0 0.0
    %88 = vmatpush1.msra.mxu0 0.0
    %89 = vmatprep.subr.mxu0 0.0
    %90 = vmatpush1.msra.mxu0 0.0
    %91 = vmatprep.subr.mxu0 0.0
    %92 = vmatpush1.msra.mxu0 0.0
    %93 = vmatprep.subr.mxu0 0.0
    %94 = vmatpush1.msra.mxu0 0.0
    %95 = vmatprep.subr.mxu0 0.0
    %96 = vmatpush1.msra.mxu0 0.0
    %97 = vmatprep.subr.mxu0 0.0
    %98 = vmatpush1.msra.mxu0 0.0
    %99 = vmatprep.subr.mxu0 0.0
    %100 = vmatpush1.msra.mxu0 0.0
    %101 = vmatprep.subr.mxu0 0.0
    %102 = vmatpush1.msra.mxu0 0.0
    %103 = vmatprep.subr.mxu0 0.0
    %104 = vmatpush1.msra.mxu0 0.0
    %105 = vmatprep.subr.mxu0 0.0
    %106 = vmatpush1.msra.mxu0 0.0
    %107 = vmatprep.subr.mxu0 0.0
    %108 = vmatpush1.msra.mxu0 0.0
    %109 = vmatprep.subr.mxu0 0.0
    %110 = vmatpush1.msra.mxu0 0.0
    %111 = vmatprep.subr.mxu0 0.0
    %112 = vmatpush1.msra.mxu0 0.0
    %113 = vmatprep.subr.mxu0 0.0
    %114 = vmatpush1.msra.mxu0 0.0
    %115 = vmatprep.subr.mxu0 0.0
    %116 = vmatpush1.msra.mxu0 0.0
    %117 = vmatprep.subr.mxu0 0.0
    %118 = vmatpush1.msra.mxu0 0.0
    %119 = vmatprep.subr.mxu0 0.0
    %120 = vmatpush1.msra.mxu0 0.0
    %121 = vmatprep.subr.mxu0 0.0
    %122 = vmatpush1.msra.mxu0 0.0
    %123 = vmatprep.subr.mxu0 0.0
    %124 = vmatpush1.msra.mxu0 0.0
    %125 = vmatprep.subr.mxu0 0.0
    %126 = vmatpush1.msra.mxu0 0.0
    %127 = vmatprep.subr.mxu0 0.0
    %128 = vmatpush1.msra.mxu0 0.0
    %129 = vmatprep.subr.mxu0 0.0
    %130 = vmatpush1.msra.mxu0 0.0
    %131 = vmatprep.subr.mxu0 0.0
    %132 = vmatpush1.msra.mxu0 0.0
    %133 = vmatprep.subr.mxu0 0.0
    %134 = vmatpush1.msra.mxu0 0.0
    %135 = vmatprep.subr.mxu0 0.0
    %136 = vmatpush1.msra.mxu0 0.0
    %137 = vmatprep.mubr.f32.mxu0 0.0
    %138 = vmatmul.mubr.f32.gmra.mrb[0].mxu0 %v68
    %v139 = vpop.f32.mrb[0].mxu0
    %v140 = vadd.f32 0.0, %v139
    %v141 = vpop.f32.mrb[0].mxu0
    %142 = vmatprep.mubr.f32.mxu0 0.0
    %143 = vmatmul.mubr.f32.gmra.mrb[0].mxu0 %v71
    %v144 = vpop.f32.mrb[0].mxu0
    %v145 = vadd.f32 0.0, %v144
    %v146 = vpop.f32.mrb[0].mxu0
    %147 = vdwg.mxu0
    %v149 = vsel %vm66, %v44, 0
    %v152 = vsel %vm66, %v45, 0
    %154 = vmatprep.subr.mxu0 0.0
    %155 = vmatpush1.msra.mxu0 %v54
    %156 = vmatprep.subr.mxu0 0.0
    %157 = vmatpush1.msra.mxu0 %v55
    %158 = vmatprep.subr.mxu0 0.0
    %159 = vmatpush1.msra.mxu0 %v56
    %160 = vmatprep.subr.mxu0 0.0
    %161 = vmatpush1.msra.mxu0 %v57
    %162 = vmatprep.subr.mxu0 0.0
    %163 = vmatpush1.msra.mxu0 0.0
    %164 = vmatprep.subr.mxu0 0.0
    %165 = vmatpush1.msra.mxu0 0.0
    %166 = vmatprep.subr.mxu0 0.0
    %167 = vmatpush1.msra.mxu0 0.0
    %168 = vmatprep.subr.mxu0 0.0
    %169 = vmatpush1.msra.mxu0 0.0
    %170 = vmatprep.subr.mxu0 0.0
    %171 = vmatpush1.msra.mxu0 0.0
    %172 = vmatprep.subr.mxu0 0.0
    %173 = vmatpush1.msra.mxu0 0.0
    %174 = vmatprep.subr.mxu0 0.0
    %175 = vmatpush1.msra.mxu0 0.0
    %176 = vmatprep.subr.mxu0 0.0
    %177 = vmatpush1.msra.mxu0 0.0
    %178 = vmatprep.subr.mxu0 0.0
    %179 = vmatpush1.msra.mxu0 0.0
    %180 = vmatprep.subr.mxu0 0.0
    %181 = vmatpush1.msra.mxu0 0.0
    %182 = vmatprep.subr.mxu0 0.0
    %183 = vmatpush1.msra.mxu0 0.0
    %184 = vmatprep.subr.mxu0 0.0
    %185 = vmatpush1.msra.mxu0 0.0
    %186 = vmatprep.subr.mxu0 0.0
    %187 = vmatpush1.msra.mxu0 0.0
    %188 = vmatprep.subr.mxu0 0.0
    %189 = vmatpush1.msra.mxu0 0.0
    %190 = vmatprep.subr.mxu0 0.0
    %191 = vmatpush1.msra.mxu0 0.0
    %192 = vmatprep.subr.mxu0 0.0
    %193 = vmatpush1.msra.mxu0 0.0
    %194 = vmatprep.subr.mxu0 0.0
    %195 = vmatpush1.msra.mxu0 0.0
    %196 = vmatprep.subr.mxu0 0.0
    %197 = vmatpush1.msra.mxu0 0.0
    %198 = vmatprep.subr.mxu0 0.0
    %199 = vmatpush1.msra.mxu0 0.0
    %200 = vmatprep.subr.mxu0 0.0
    %201 = vmatpush1.msra.mxu0 0.0
    %202 = vmatprep.subr.mxu0 0.0
    %203 = vmatpush1.msra.mxu0 0.0
    %204 = vmatprep.subr.mxu0 0.0
    %205 = vmatpush1.msra.mxu0 0.0
    %206 = vmatprep.subr.mxu0 0.0
    %207 = vmatpush1.msra.mxu0 0.0
    %208 = vmatprep.subr.mxu0 0.0
    %209 = vmatpush1.msra.mxu0 0.0
    %210 = vmatprep.subr.mxu0 0.0
    %211 = vmatpush1.msra.mxu0 0.0
    %212 = vmatprep.subr.mxu0 0.0
    %213 = vmatpush1.msra.mxu0 0.0
    %214 = vmatprep.subr.mxu0 0.0
    %215 = vmatpush1.msra.mxu0 0.0
    %216 = vmatprep.subr.mxu0 0.0
    %217 = vmatpush1.msra.mxu0 0.0
    %218 = vmatprep.mubr.f32.mxu0 0.0
    %219 = vmatmul.mubr.f32.gmra.mrb[0].mxu0 %v149
    %v220 = vpop.f32.mrb[0].mxu0
    %v221 = vadd.f32 0.0, %v220
    %v222 = vpop.f32.mrb[0].mxu0
    %223 = vmatprep.mubr.f32.mxu0 0.0
    %224 = vmatmul.mubr.f32.gmra.mrb[0].mxu0 %v152
    %v225 = vpop.f32.mrb[0].mxu0
    %v226 = vadd.f32 0.0, %v225
    %v227 = vpop.f32.mrb[0].mxu0
    %228 = vdwg.mxu0
    %v230 = vsel %vm66, %v46, 0
    %v233 = vsel %vm66, %v47, 0
    %235 = vmatprep.subr.mxu0 0.0
    %236 = vmatpush1.msra.mxu0 %v58
    %237 = vmatprep.subr.mxu0 0.0
    %238 = vmatpush1.msra.mxu0 %v59
    %239 = vmatprep.subr.mxu0 0.0
    %240 = vmatpush1.msra.mxu0 %v60
    %241 = vmatprep.subr.mxu0 0.0
    %242 = vmatpush1.msra.mxu0 %v61
    %243 = vmatprep.subr.mxu0 0.0
    %244 = vmatpush1.msra.mxu0 0.0
    %245 = vmatprep.subr.mxu0 0.0
    %246 = vmatpush1.msra.mxu0 0.0
    %247 = vmatprep.subr.mxu0 0.0
    %248 = vmatpush1.msra.mxu0 0.0
    %249 = vmatprep.subr.mxu0 0.0
    %250 = vmatpush1.msra.mxu0 0.0
    %251 = vmatprep.subr.mxu0 0.0
    %252 = vmatpush1.msra.mxu0 0.0
    %253 = vmatprep.subr.mxu0 0.0
    %254 = vmatpush1.msra.mxu0 0.0
    %255 = vmatprep.subr.mxu0 0.0
    %256 = vmatpush1.msra.mxu0 0.0
    %257 = vmatprep.subr.mxu0 0.0
    %258 = vmatpush1.msra.mxu0 0.0
    %259 = vmatprep.subr.mxu0 0.0
    %260 = vmatpush1.msra.mxu0 0.0
    %261 = vmatprep.subr.mxu0 0.0
    %262 = vmatpush1.msra.mxu0 0.0
    %263 = vmatprep.subr.mxu0 0.0
    %264 = vmatpush1.msra.mxu0 0.0
    %265 = vmatprep.subr.mxu0 0.0
    %266 = vmatpush1.msra.mxu0 0.0
    %267 = vmatprep.subr.mxu0 0.0
    %268 = vmatpush1.msra.mxu0 0.0
    %269 = vmatprep.subr.mxu0 0.0
    %270 = vmatpush1.msra.mxu0 0.0
    %271 = vmatprep.subr.mxu0 0.0
    %272 = vmatpush1.msra.mxu0 0.0
    %273 = vmatprep.subr.mxu0 0.0
    %274 = vmatpush1.msra.mxu0 0.0
    %275 = vmatprep.subr.mxu0 0.0
    %276 = vmatpush1.msra.mxu0 0.0
    %277 = vmatprep.subr.mxu0 0.0
    %278 = vmatpush1.msra.mxu0 0.0
    %279 = vmatprep.subr.mxu0 0.0
    %280 = vmatpush1.msra.mxu0 0.0
    %281 = vmatprep.subr.mxu0 0.0
    %282 = vmatpush1.msra.mxu0 0.0
    %283 = vmatprep.subr.mxu0 0.0
    %284 = vmatpush1.msra.mxu0 0.0
    %285 = vmatprep.subr.mxu0 0.0
    %286 = vmatpush1.msra.mxu0 0.0
    %287 = vmatprep.subr.mxu0 0.0
    %288 = vmatpush1.msra.mxu0 0.0
    %289 = vmatprep.subr.mxu0 0.0
    %290 = vmatpush1.msra.mxu0 0.0
    %291 = vmatprep.subr.mxu0 0.0
    %292 = vmatpush1.msra.mxu0 0.0
    %293 = vmatprep.subr.mxu0 0.0
    %294 = vmatpush1.msra.mxu0 0.0
    %295 = vmatprep.subr.mxu0 0.0
    %296 = vmatpush1.msra.mxu0 0.0
    %297 = vmatprep.subr.mxu0 0.0
    %298 = vmatpush1.msra.mxu0 0.0
    %299 = vmatprep.mubr.f32.mxu0 0.0
    %300 = vmatmul.mubr.f32.gmra.mrb[0].mxu0 %v230
    %v301 = vpop.f32.mrb[0].mxu0
    %v302 = vadd.f32 0.0, %v301
    %v303 = vpop.f32.mrb[0].mxu0
    %304 = vmatprep.mubr.f32.mxu0 0.0
    %305 = vmatmul.mubr.f32.gmra.mrb[0].mxu0 %v233
    %v306 = vpop.f32.mrb[0].mxu0
    %v307 = vadd.f32 0.0, %v306
    %v308 = vpop.f32.mrb[0].mxu0
    %309 = vdwg.mxu0
    %v311 = vsel %vm66, %v48, 0
    %v314 = vsel %vm66, %v49, 0
    %316 = vmatprep.subr.mxu0 0.0
    %317 = vmatpush1.msra.mxu0 %v62
    %318 = vmatprep.subr.mxu0 0.0
    %319 = vmatpush1.msra.mxu0 %v63
    %320 = vmatprep.subr.mxu0 0.0
    %321 = vmatpush1.msra.mxu0 %v64
    %322 = vmatprep.subr.mxu0 0.0
    %323 = vmatpush1.msra.mxu0 %v65
    %324 = vmatprep.subr.mxu0 0.0
    %325 = vmatpush1.msra.mxu0 0.0
    %326 = vmatprep.subr.mxu0 0.0
    %327 = vmatpush1.msra.mxu0 0.0
    %328 = vmatprep.subr.mxu0 0.0
    %329 = vmatpush1.msra.mxu0 0.0
    %330 = vmatprep.subr.mxu0 0.0
    %331 = vmatpush1.msra.mxu0 0.0
    %332 = vmatprep.subr.mxu0 0.0
    %333 = vmatpush1.msra.mxu0 0.0
    %334 = vmatprep.subr.mxu0 0.0
    %335 = vmatpush1.msra.mxu0 0.0
    %336 = vmatprep.subr.mxu0 0.0
    %337 = vmatpush1.msra.mxu0 0.0
    %338 = vmatprep.subr.mxu0 0.0
    %339 = vmatpush1.msra.mxu0 0.0
    %340 = vmatprep.subr.mxu0 0.0
    %341 = vmatpush1.msra.mxu0 0.0
    %342 = vmatprep.subr.mxu0 0.0
    %343 = vmatpush1.msra.mxu0 0.0
    %344 = vmatprep.subr.mxu0 0.0
    %345 = vmatpush1.msra.mxu0 0.0
    %346 = vmatprep.subr.mxu0 0.0
    %347 = vmatpush1.msra.mxu0 0.0
    %348 = vmatprep.subr.mxu0 0.0
    %349 = vmatpush1.msra.mxu0 0.0
    %350 = vmatprep.subr.mxu0 0.0
    %351 = vmatpush1.msra.mxu0 0.0
    %352 = vmatprep.subr.mxu0 0.0
    %353 = vmatpush1.msra.mxu0 0.0
    %354 = vmatprep.subr.mxu0 0.0
    %355 = vmatpush1.msra.mxu0 0.0
    %356 = vmatprep.subr.mxu0 0.0
    %357 = vmatpush1.msra.mxu0 0.0
    %358 = vmatprep.subr.mxu0 0.0
    %359 = vmatpush1.msra.mxu0 0.0
    %360 = vmatprep.subr.mxu0 0.0
    %361 = vmatpush1.msra.mxu0 0.0
    %362 = vmatprep.subr.mxu0 0.0
    %363 = vmatpush1.msra.mxu0 0.0
    %364 = vmatprep.subr.mxu0 0.0
    %365 = vmatpush1.msra.mxu0 0.0
    %366 = vmatprep.subr.mxu0 0.0
    %367 = vmatpush1.msra.mxu0 0.0
    %368 = vmatprep.subr.mxu0 0.0
    %369 = vmatpush1.msra.mxu0 0.0
    %370 = vmatprep.subr.mxu0 0.0
    %371 = vmatpush1.msra.mxu0 0.0
    %372 = vmatprep.subr.mxu0 0.0
    %373 = vmatpush1.msra.mxu0 0.0
    %374 = vmatprep.subr.mxu0 0.0
    %375 = vmatpush1.msra.mxu0 0.0
    %376 = vmatprep.subr.mxu0 0.0
    %377 = vmatpush1.msra.mxu0 0.0
    %378 = vmatprep.subr.mxu0 0.0
    %379 = vmatpush1.msra.mxu0 0.0
    %380 = vmatprep.mubr.f32.mxu0 0.0
    %381 = vmatmul.mubr.f32.gmra.mrb[0].mxu0 %v311
    %v382 = vpop.f32.mrb[0].mxu0
    %v383 = vadd.f32 0.0, %v382
    %v384 = vpop.f32.mrb[0].mxu0
    %385 = vmatprep.mubr.f32.mxu0 0.0
    %386 = vmatmul.mubr.f32.gmra.mrb[0].mxu0 %v314
    %v387 = vpop.f32.mrb[0].mxu0
    %v388 = vadd.f32 0.0, %v387
    %v389 = vpop.f32.mrb[0].mxu0
    %390 = vdwg.mxu0
    %s391 = sld [smem:[#allocation3]]
    %v392 = vstv %s391
    %v393 = vmul.f32 %v140, %v392
    %v394 = vmul.f32 %v145, %v392
    %v395 = vmul.f32 %v221, %v392
    %v396 = vmul.f32 %v226, %v392
    %v397 = vmul.f32 %v302, %v392
    %v398 = vmul.f32 %v307, %v392
    %v399 = vmul.f32 %v383, %v392
    %v400 = vmul.f32 %v388, %v392
    %401 = vst.msk [vmem:[#allocation9] sm:$0xff] %vm66, %v393
    %402 = vst.msk [vmem:[#allocation9 + $0x8] sm:$0xff] %vm66, %v394
    %403 = vst.msk [vmem:[#allocation9 + $0x10] sm:$0xff] %vm66, %v395
    %404 = vst.msk [vmem:[#allocation9 + $0x18] sm:$0xff] %vm66, %v396
    %405 = vst.msk [vmem:[#allocation9 + $0x20] sm:$0xff] %vm66, %v397
    %406 = vst.msk [vmem:[#allocation9 + $0x28] sm:$0xff] %vm66, %v398
    %407 = vst.msk [vmem:[#allocation9 + $0x30] sm:$0xff] %vm66, %v399
    %408 = vst.msk [vmem:[#allocation9 + $0x38] sm:$0xff] %vm66, %v400
    // Predicated region
    $region18: #{tpu_custom_call.1} parent=1 // pred_check
      _
    $region19: #{tpu_custom_call.1} parent=1 // pred_check_branch
      %410 = sbr.rel (0) target = $region21
    $region20: #{tpu_custom_call.1} parent=1 // pred_region
      %s412 = ssub.s32 1024, 1024
      %413 = vsyncadd [#allocation6], %s412
      %s414 = sshll.u32 [#allocation9], 4
      %s415 = int_to_ptr.vmem [resolvable:$true] %s414
      %420 = dma.vmem_to_hbm [thread:$0]  %s415, 1024, %s3, [#allocation6], 128, 128, 8
    $region21: #{tpu_custom_call.1} parent=1 // pred_fallthru
      _
    // Predicated region
    $region22: #{tpu_custom_call.1} parent=1 // pred_check
      _
    $region23: #{tpu_custom_call.1} parent=1 // pred_check_branch
      %422 = sbr.rel (0) target = $region25
    $region24: #{tpu_custom_call.1} parent=1 // pred_region
      %423 = dma.done [#allocation6], 1024
    $region25: #{tpu_custom_call.1} parent=1 // pred_fallthru
      _
    %424 = vsyncpa [#allocation5], 1
    %425 = vsyncpa [#allocation8], 1
    %426 = vsyncpa [#allocation6], 1

</llo_original>
